<compile_context>
chip_gen: v7x
topology: tpu7x:2x2x1
jax: 0.10.0
libtpu: 0.0.40
codegen_flags: <defaults>
</compile_context>

<pallas_src>
import jax
import jax.numpy as jnp
from jax.experimental import pallas as pl
from jax.experimental.pallas import tpu as pltpu


def _fused_cat_slice_cat_kernel(a_ref, b_ref, c_ref, o_ref):
    a = a_ref[...]                              # [1, 4]  = x1[0]
    b = b_ref[...]                              # [1, 4]  = x1[1]
    c = c_ref[...]                              # [1, 4]  = x1[2] flattened
    v1 = jnp.concatenate([a, b], axis=1)        # [1, 8]  (v2 == v3 == v1 after clamp)
    r = jnp.maximum(v1, 0.0)                    # relu(v1), reused for both halves of v5
    # v9 flat = [ relu(v1) | relu(v1) | v1 | x1[2] ]  -> [1, 28]
    o_ref[...] = jnp.concatenate([r, r, v1, c], axis=1)


def model_forward(x1_0, x1_1, x1_2):
    # Hard-coded channel sizes (4/4/4 -> 28); assert so a shape change fails loudly.
    assert x1_0.shape == (1, 4), x1_0.shape
    assert x1_1.shape == (1, 4), x1_1.shape
    assert x1_2.shape == (1, 4, 1, 1), x1_2.shape

    a = x1_0.astype(jnp.float32)                    # [1, 4]
    b = x1_1.astype(jnp.float32)                    # [1, 4]
    c = x1_2.astype(jnp.float32).reshape(1, 4)      # [1, 4] (metadata-only reshape)

    vmem_spec = pl.BlockSpec(memory_space=pltpu.MemorySpace.VMEM)
    out = pl.pallas_call(
        _fused_cat_slice_cat_kernel,
        out_shape=jax.ShapeDtypeStruct((1, 28), jnp.float32),
        in_specs=[vmem_spec, vmem_spec, vmem_spec],
        out_specs=vmem_spec,
    )(a, b, c)

    # v9 is NCHW [1, 28, 1, 1]; this reshape is free (trailing unit dims).
    return out.reshape(1, 28, 1, 1)


def _reference(x1_0, x1_1, x1_2):
    v1 = jnp.concatenate([x1_0, x1_1], axis=1)              # [1, 8]
    v2 = v1[:, 0:9223372036854775802]                       # clamp -> v1
    v3 = v2[:, 0:16]                                        # clamp -> [1, 8]
    v4 = jnp.concatenate([v1, v3], axis=1)                  # [1, 16]
    v5 = jax.nn.relu(v4)
    v6 = v5.reshape(1, 1, 4, 4)
    v7 = jnp.concatenate([v6.reshape(1, -1), v1], axis=1)   # [1, 24]
    v8 = v7.reshape(1, 24, 1, 1)
    v9 = jnp.concatenate([v8, x1_2], axis=1)                # [1, 28, 1, 1]
    return v9


if __name__ == "__main__":
    key = jax.random.PRNGKey(0)
    k0, k1, k2 = jax.random.split(key, 3)
    x1_0 = jax.random.normal(k0, (1, 4), dtype=jnp.float32)
    x1_1 = jax.random.normal(k1, (1, 4), dtype=jnp.float32)
    x1_2 = jax.random.normal(k2, (1, 4, 1, 1), dtype=jnp.float32)

    out = model_forward(x1_0, x1_1, x1_2)
    out = jax.block_until_ready(out)

    ref = _reference(x1_0, x1_1, x1_2)
    assert out.shape == (1, 28, 1, 1), out.shape
    assert jnp.allclose(out, ref, atol=1e-6), "mismatch vs reference"

    print("KERNEL_OK")
</pallas_src>

<mosaic_0001>
module attributes {stable_mosaic.version = 11 : i64} {
  func.func @_fused_cat_slice_cat_kernel(%arg0: memref<1x4xf32, #tpu.memory_space<vmem>>, %arg1: memref<1x4xf32, #tpu.memory_space<vmem>>, %arg2: memref<1x4xf32, #tpu.memory_space<vmem>>, %arg3: memref<1x28xf32, #tpu.memory_space<vmem>>) attributes {dimension_semantics = [], scalar_prefetch = 0 : i64, scratch_operands = 0 : i64, tpu.core_type = #tpu.core_type<tc>} {
    %c0 = arith.constant 0 : index
    %c0_0 = arith.constant 0 : index
    %0 = vector.load %arg0[%c0, %c0_0] : memref<1x4xf32, #tpu.memory_space<vmem>>, vector<1x4xf32>
    %c0_1 = arith.constant 0 : index
    %c0_2 = arith.constant 0 : index
    %1 = vector.load %arg1[%c0_1, %c0_2] : memref<1x4xf32, #tpu.memory_space<vmem>>, vector<1x4xf32>
    %c0_3 = arith.constant 0 : index
    %c0_4 = arith.constant 0 : index
    %2 = vector.load %arg2[%c0_3, %c0_4] : memref<1x4xf32, #tpu.memory_space<vmem>>, vector<1x4xf32>
    %3 = tpu.concatenate %0, %1 in 1 : vector<1x4xf32>, vector<1x4xf32> -> vector<1x8xf32>
    %cst = arith.constant 0.000000e+00 : f32
    %4 = vector.broadcast %cst : f32 to vector<1x8xf32>
    %5 = arith.maximumf %3, %4 : vector<1x8xf32>
    %6 = tpu.concatenate %5, %5, %3, %2 in 1 : vector<1x8xf32>, vector<1x8xf32>, vector<1x8xf32>, vector<1x4xf32> -> vector<1x28xf32>
    %c0_5 = arith.constant 0 : index
    %c0_6 = arith.constant 0 : index
    %7 = vector.load %arg3[%c0_5, %c0_6] : memref<1x28xf32, #tpu.memory_space<vmem>>, vector<1x28xf32>
    tpu.vector_store %arg3[%c0_5, %c0_6], %6 {strides = array<i32>} : memref<1x28xf32, #tpu.memory_space<vmem>>, vector<1x28xf32>,
    return
  }
}

</mosaic_0001>

<llo_original>
// kernel: tpu_custom_call.1
$region0: #{tpu_custom_call.1}
  #allocation0 [shape = 'u32[]', space=smem, size = 0x4, offset = 0x4, fixed_abs, tag = 'smem constant byte address 0x4 - core index']
  #allocation1 [shape = 'u32[144,128]{1,0:T(1,128)}', space=vmem, size = 0x12000, scoped, tag = 'internal scratch']
  %s0 = inlined_call_operand.hbm [shape: f32[1,4], index: 0, kind: input, shape index: {}]
  %s1 = inlined_call_operand.vmem [shape: f32[1,4], index: 1, kind: input, shape index: {}]
  %s2 = inlined_call_operand.vmem [shape: f32[1,4], index: 2, kind: input, shape index: {}]
  %s3 = inlined_call_operand.hbm [shape: f32[1,28], index: 3, kind: output, shape index: {}]
  %s4 = sld [smem:[#allocation0]]
  $region26: #{tpu_custom_call.1} parent=0
    _
  %s6 = ssub.s32 1, %s4
  %s7 = scalar_select 0, %s6, %s4
  $region1: #{tpu_custom_call.1} parent=0
    #allocation2 [shape = 'u8[512]{0}', space=vmem, size = 0x400, scoped, tag = 'input window, operand 0, single buffered']
    #allocation3 [shape = 's32[1]{0}', space=sflag, size = 0x4, scoped, tag = 'scoped memory for tpu_custom_call.1']
    #allocation4 [shape = 's32[1]{0}', space=sflag, size = 0x4, scoped, tag = 'scoped memory for tpu_custom_call.1']
    #allocation5 [shape = 'u8[512]{0}', space=vmem, size = 0x400, scoped, tag = 'output window, operand 0, single buffered']
    %8 = vsyncpa [#allocation3], 0
    %9 = vsyncpa [#allocation4], 0
    // Predicated region
    $region2: #{tpu_custom_call.1} parent=1 // pred_check
      _
    $region3: #{tpu_custom_call.1} parent=1 // pred_check_branch
      %11 = sbr.rel (0) target = $region5
    $region4: #{tpu_custom_call.1} parent=1 // pred_region
      %s13 = ssub.s32 16, 16
      %14 = vsyncadd [#allocation3], %s13
      %s16 = sshll.u32 [#allocation2], 4
      %s17 = int_to_ptr.vmem [resolvable:$true] %s16
      %19 = dma.hbm_to_vmem [thread:$0]  %s0, 16, %s17, [#allocation3]
    $region5: #{tpu_custom_call.1} parent=1 // pred_fallthru
      _
    // Predicated region
    $region6: #{tpu_custom_call.1} parent=1 // pred_check
      _
    $region7: #{tpu_custom_call.1} parent=1 // pred_check_branch
      %21 = sbr.rel (0) target = $region9
    $region8: #{tpu_custom_call.1} parent=1 // pred_region
      _
    $region9: #{tpu_custom_call.1} parent=1 // pred_fallthru
      _
    // Predicated region
    $region10: #{tpu_custom_call.1} parent=1 // pred_check
      _
    $region11: #{tpu_custom_call.1} parent=1 // pred_check_branch
      %23 = sbr.rel (0) target = $region13
    $region12: #{tpu_custom_call.1} parent=1 // pred_region
      _
    $region13: #{tpu_custom_call.1} parent=1 // pred_fallthru
      _
    // Predicated region
    $region14: #{tpu_custom_call.1} parent=1 // pred_check
      _
    $region15: #{tpu_custom_call.1} parent=1 // pred_check_branch
      %25 = sbr.rel (0) target = $region17
    $region16: #{tpu_custom_call.1} parent=1 // pred_region
      %26 = dma.done [#allocation3], 16
    $region17: #{tpu_custom_call.1} parent=1 // pred_fallthru
      _
    %v27 = vld [vmem:[#allocation2] sm:$0x1]
    %v28 = vld [vmem:[%s1] sm:$0x1]
    %v29 = vld [vmem:[%s2] sm:$0x1]
    %v31 = vlaneseq
    %v32 = vshrl.u32 %v31, 7
    %v33 = vsub.s32 0, %v32
    %v34 = vrot.slane %v28, %v33
    %35 = vrot.lane.b32.xlu0 %v34, 4
    %v36 = vpop.permute.xlu0 %35
    %vm38 = vcmask 31744
    %v39 = vsel %vm38, %v27, %v36
    %v40 = vmax.f32 %v39, 0.0
    %42 = vrot.lane.b32.xlu0 %v40, 8
    %v43 = vpop.permute.xlu0 %42
    %46 = vrot.lane.b32.xlu0 %v39, 16
    %v47 = vpop.permute.xlu0 %46
    %v50 = vlaneseq
    %v51 = vshrl.u32 %v50, 7
    %v52 = vsub.s32 0, %v51
    %v53 = vrot.slane %v29, %v52
    %54 = vrot.lane.b32.xlu0 %v53, 24
    %v55 = vpop.permute.xlu0 %54
    %vm57 = vcmask 64512
    %v58 = vsel %vm57, %v40, %v43
    %vm59 = vcmask 130048
    %v60 = vsel %vm59, %v58, %v47
    %vm61 = vcmask 195584
    %v62 = vsel %vm61, %v60, %v55
    %vm63 = vcmask 221184
    %64 = vst.msk [vmem:[#allocation5] sm:$0x1] %vm63, %v62
    // Predicated region
    $region18: #{tpu_custom_call.1} parent=1 // pred_check
      _
    $region19: #{tpu_custom_call.1} parent=1 // pred_check_branch
      %66 = sbr.rel (0) target = $region21
    $region20: #{tpu_custom_call.1} parent=1 // pred_region
      %s68 = ssub.s32 16, 16
      %69 = vsyncadd [#allocation4], %s68
      %s71 = sshll.u32 [#allocation5], 4
      %s72 = int_to_ptr.vmem [resolvable:$true] %s71
      %74 = dma.vmem_to_hbm [thread:$0]  %s72, 16, %s3, [#allocation4]
    $region21: #{tpu_custom_call.1} parent=1 // pred_fallthru
      _
    // Predicated region
    $region22: #{tpu_custom_call.1} parent=1 // pred_check
      _
    $region23: #{tpu_custom_call.1} parent=1 // pred_check_branch
      %76 = sbr.rel (0) target = $region25
    $region24: #{tpu_custom_call.1} parent=1 // pred_region
      %77 = dma.done [#allocation4], 16
    $region25: #{tpu_custom_call.1} parent=1 // pred_fallthru
      _
    %78 = vsyncpa [#allocation3], 1
    %79 = vsyncpa [#allocation4], 1

</llo_original>
